<compile_context>
chip_gen: v6e
topology: v6e:2x2x1
jax: 0.10.0
libtpu: 0.0.40
codegen_flags: <defaults>
</compile_context>

<pallas_src>
import math
import functools

import jax
import jax.numpy as jnp
from jax import lax
from jax.experimental import pallas as pl
from jax.experimental.pallas import tpu as pltpu


_INV_SQRT2 = 1.0 / math.sqrt(2.0)


def _gelu_exact(x):
    # PyTorch nn.GELU() default = exact erf formulation (do NOT swap for tanh).
    return 0.5 * x * (1.0 + lax.erf(x * _INV_SQRT2))


def _round_up(x, m):
    return ((x + m - 1) // m) * m


def _tree_search_scores_kernel(
    x_ref,
    w1_ref, b1_ref,   # compress: Linear(E -> E//4)
    w2_ref, b2_ref,   # compress: Linear(E//4 -> E)
    w3_ref, b3_ref,   # scorer:   Linear(E -> E//2)
    w4_ref, b4_ref,   # scorer:   Linear(E//2 -> 1); w4 passed as a (1, E//2) row
    out_ref,          # (1, 1, tm) lane-dense scores (rows on the lane axis)
):
    wdt = w1_ref.dtype                                               # f32 or bf16
    x = x_ref[...]                                                   # (tm, E)
    h = jnp.dot(x, w1_ref[...], preferred_element_type=jnp.float32) + b1_ref[...]
    h = _gelu_exact(h)                                               # (tm, E//4) f32
    c = jnp.dot(h.astype(wdt), w2_ref[...],
                preferred_element_type=jnp.float32) + b2_ref[...]    # compressed (tm, E)
    g = jnp.dot(c.astype(wdt), w3_ref[...],
                preferred_element_type=jnp.float32) + b3_ref[...]
    g = _gelu_exact(g)                                               # (tm, E//2) f32
    # Final 1-wide projection: contract w4 (1, E//2) against g's LAST dim so
    # the tm scores land on the lane axis -> one unmasked lane-dense store,
    # instead of a (tm, 1) column of masked per-lane stores.
    s = lax.dot_general(w4_ref[...], g.astype(wdt),
                        dimension_numbers=(((1,), (1,)), ((), ())),
                        preferred_element_type=jnp.float32)          # (1, tm)
    s = s + b4_ref[...]                                              # bias (1,1) broadcasts
    out_ref[...] = s[None].astype(out_ref.dtype)                     # (1, 1, tm)


def tree_search_scores(x_flat, params, *, tm=None, use_bf16=False):
    """x_flat: (R, E) float32 -> scores (R,) float32 via one fused Pallas kernel."""
    R, E = x_flat.shape
    w1, b1, w2, b2, w3, b3, w4, b4 = params
    E4 = w1.shape[1]
    E2 = w3.shape[1]
    w4_row = w4.reshape(1, E2)        # (E//2, 1) -> (1, E//2), free reshape

    if use_bf16:
        # Flag-gated bf16 matmul path: halves HBM bytes for x and takes the
        # fast bf16 MXU path (notably on v5e).  Accumulation, biases and GELU
        # stay f32.  Ideally the caller already provides bf16 activations.
        x_flat = x_flat.astype(jnp.bfloat16)
        w1, w2, w3, w4_row = (w.astype(jnp.bfloat16)
                              for w in (w1, w2, w3, w4_row))

    x_bytes = jnp.dtype(x_flat.dtype).itemsize
    w_bytes = jnp.dtype(w1.dtype).itemsize

    # ---- row tile selection ------------------------------------------------
    # Target ~2 MiB of x per tile (amortizes ~0.35 us per-grid-step overhead
    # and keeps the pipeline near HBM roofline); clamp to [256, 4096] and to a
    # multiple of 128.  Tiny problems collapse into a single grid step.
    if tm is None:
        tm_target = max(256, min(4096, _round_up((2 << 20) // (x_bytes * E), 128)))
    else:
        tm_target = max(128, _round_up(tm, 128))
    r_up = _round_up(R, 128)
    tm_eff = min(tm_target, r_up)
    # Megacore: if everything would land in one grid step but there is real
    # work, split into >= 2 steps so the "parallel" axis can shard across TCs.
    if tm_eff >= r_up and R >= 1024:
        tm_eff = max(256, _round_up(pl.cdiv(R, 2), 128))
    grid = pl.cdiv(R, tm_eff)
    # NOTE: no jnp.pad of x.  The ragged tail block reads OOB rows (garbage);
    # each score depends only on its own row, and tail scores are sliced away
    # by [:R] below, before any top_k / cumsum.

    def const_spec(shape):
        # Weights / biases: constant index_map, so double buffering buys
        # nothing -> single-buffer to halve their resident VMEM footprint.
        if hasattr(pl, "Buffered"):
            return pl.BlockSpec(shape, lambda i: (0,) * len(shape),
                                pipeline_mode=pl.Buffered(1))
        return pl.BlockSpec(shape, lambda i: (0,) * len(shape))

    weight_elems = E * E4 + E4 * E + E * E2 + E2
    bias_elems = E4 + E + E2 + 1
    cost = pl.CostEstimate(
        flops=2 * R * (E * E4 + E4 * E + E * E2 + E2),
        transcendentals=R * (E4 + E2),
        bytes_accessed=(x_bytes * R * E + 4 * grid * tm_eff
                        + w_bytes * weight_elems + 4 * bias_elems),
    )

    # ---- VMEM budget ---------------------------------------------------------
    # double-buffered x/out tiles + single-buffered resident weights + f32
    # intermediates (h, c, g).  Cap is generation-aware with explicit headroom
    # for compiler-managed scratch (56 MiB on v7x, ~120 MiB on v5e/v6e).
    vmem_est = (2 * tm_eff * E * x_bytes
                + 2 * tm_eff * 4
                + (w_bytes * weight_elems + 4 * bias_elems)
                + tm_eff * (E4 + E + E2) * 4)
    try:
        vmem_cap = int(getattr(pltpu.get_tpu_info(), "vmem_capacity_bytes",
                               64 << 20))
    except Exception:
        vmem_cap = 64 << 20
    vmem_cap_use = max(vmem_cap - (8 << 20), 16 << 20)
    vmem_limit = int(min(vmem_cap_use, max(2 * vmem_est + (4 << 20), 16 << 20)))

    out = pl.pallas_call(
        _tree_search_scores_kernel,
        out_shape=jax.ShapeDtypeStruct((grid, 1, tm_eff), jnp.float32),
        grid_spec=pltpu.PrefetchScalarGridSpec(
            num_scalar_prefetch=0,
            grid=(grid,),
            in_specs=[
                pl.BlockSpec((tm_eff, E), lambda i: (i, 0)),
                const_spec((E, E4)), const_spec((1, E4)),
                const_spec((E4, E)), const_spec((1, E)),
                const_spec((E, E2)), const_spec((1, E2)),
                const_spec((1, E2)), const_spec((1, 1)),
            ],
            out_specs=pl.BlockSpec((1, 1, tm_eff), lambda i: (i, 0, 0)),
        ),
        compiler_params=pltpu.CompilerParams(
            dimension_semantics=("parallel",),
            vmem_limit_bytes=vmem_limit),
        cost_estimate=cost,
    )(x_flat, w1, b1, w2, b2, w3, b3, w4_row, b4)

    # Keep this slice BEFORE any top_k / cumsum: tail (>=R) lanes are garbage.
    return out.reshape(-1)[:R]


def init_params(key, embed_dim):
    """Deterministic init matching PyTorch Linear default (uniform +-1/sqrt(fan_in)).
    Weights stored transposed as (in, out) for the kernel."""
    E = embed_dim
    dims = [(E, E // 4), (E // 4, E), (E, E // 2), (E // 2, 1)]
    params = []
    for (fan_in, fan_out) in dims:
        key, kw, kb = jax.random.split(key, 3)
        bound = 1.0 / math.sqrt(fan_in)
        w = jax.random.uniform(kw, (fan_in, fan_out), jnp.float32, -bound, bound)
        b = jax.random.uniform(kb, (1, fan_out), jnp.float32, -bound, bound)
        params += [w, b]
    return tuple(params)


@functools.partial(jax.jit,
                   static_argnames=("max_branches", "search_type", "use_bf16"))
def optimized_tree_search(node_states, params, *, max_branches=5,
                          search_type="bfs", use_bf16=False):
    """Mirror of OptimizedTreeSearch.forward.

    node_states: (B, N, E) float32
    returns (indices, scores) with indices (B, k) int32, scores (B, N) float32
    """
    B, N, E = node_states.shape
    scores = tree_search_scores(node_states.reshape(B * N, E), params,
                                use_bf16=use_bf16).reshape(B, N)
    k = min(max_branches, N)
    if search_type == "bfs":
        _, indices = lax.top_k(scores, k)            # topk along dim=1 (last)
        return indices, scores
    else:
        # TODO(synk): cumsum + top-k over tiny N has no clean Pallas win; kept in JAX glue.
        path_scores = jnp.cumsum(scores, axis=1)
        _, indices = lax.top_k(path_scores, k)
        return indices, scores


def _reference_scores(node_states, params):
    w1, b1, w2, b2, w3, b3, w4, b4 = params
    h = _gelu_exact(node_states @ w1 + b1[0])
    c = h @ w2 + b2[0]
    g = _gelu_exact(c @ w3 + b3[0])
    return (g @ w4 + b4[0])[..., 0]


if __name__ == "__main__":
    key = jax.random.PRNGKey(0)
    max_branches = 5

    # --- small case (matches the module's toy shapes) -----------------------
    B, N, E = 2, 8, 32
    k_x, k_p, key = jax.random.split(key, 3)
    node_states = jax.random.normal(k_x, (B, N, E), jnp.float32)
    params = init_params(k_p, E)

    idx_bfs, scores_bfs = optimized_tree_search(
        node_states, params, max_branches=max_branches, search_type="bfs")
    idx_dfs, scores_dfs = optimized_tree_search(
        node_states, params, max_branches=max_branches, search_type="dfs")
    jax.block_until_ready((idx_bfs, scores_bfs, idx_dfs, scores_dfs))

    ref = _reference_scores(node_states, params)
    assert jnp.allclose(scores_bfs, ref, atol=1e-4, rtol=1e-4)
    assert idx_bfs.shape == (B, min(max_branches, N))
    assert idx_dfs.shape == (B, min(max_branches, N))

    # --- ragged single-block case (R=400 not a tile multiple, no pad) -------
    B2, N2, E2_ = 2, 200, 128
    k_x2, k_p2, key = jax.random.split(key, 3)
    node_states2 = jax.random.normal(k_x2, (B2, N2, E2_), jnp.float32)
    params2 = init_params(k_p2, E2_)

    idx2, scores2 = optimized_tree_search(
        node_states2, params2, max_branches=max_branches, search_type="bfs")
    jax.block_until_ready((idx2, scores2))
    ref2 = _reference_scores(node_states2, params2)
    assert jnp.allclose(scores2, ref2, atol=1e-4, rtol=1e-4)
    assert idx2.shape == (B2, min(max_branches, N2))

    # --- larger case: multi-step grid + ragged tail block (R=2400, grid=2) --
    B3, N3 = 4, 600
    k_x3, key = jax.random.split(key, 2)
    node_states3 = jax.random.normal(k_x3, (B3, N3, E2_), jnp.float32)
    idx3, scores3 = optimized_tree_search(
        node_states3, params2, max_branches=max_branches, search_type="dfs")
    jax.block_until_ready((idx3, scores3))
    ref3 = _reference_scores(node_states3, params2)
    assert jnp.allclose(scores3, ref3, atol=1e-4, rtol=1e-4)
    assert idx3.shape == (B3, min(max_branches, N3))

    # --- flag-gated bf16 path (relaxed tolerance) ----------------------------
    idx_bf, scores_bf = optimized_tree_search(
        node_states2, params2, max_branches=max_branches, search_type="bfs",
        use_bf16=True)
    jax.block_until_ready((idx_bf, scores_bf))
    assert float(jnp.max(jnp.abs(scores_bf - ref2))) < 5e-2

    print("KERNEL_OK")
</pallas_src>

<mosaic_0001>
module attributes {stable_mosaic.version = 11 : i64} {
  func.func @_tree_search_scores_kernel(%arg0: i32, %arg1: memref<128x32xf32, #tpu.memory_space<vmem>>, %arg2: memref<32x8xf32, #tpu.memory_space<vmem>>, %arg3: memref<1x8xf32, #tpu.memory_space<vmem>>, %arg4: memref<8x32xf32, #tpu.memory_space<vmem>>, %arg5: memref<1x32xf32, #tpu.memory_space<vmem>>, %arg6: memref<32x16xf32, #tpu.memory_space<vmem>>, %arg7: memref<1x16xf32, #tpu.memory_space<vmem>>, %arg8: memref<1x16xf32, #tpu.memory_space<vmem>>, %arg9: memref<1x1xf32, #tpu.memory_space<vmem>>, %arg10: memref<1x1x128xf32, #tpu.memory_space<vmem>>) attributes {dimension_semantics = [#tpu.dimension_semantics<parallel>], iteration_bounds = array<i64: 1>, scalar_prefetch = 0 : i64, scratch_operands = 0 : i64, tpu.core_type = #tpu.core_type<tc>, window_params = [{transform_indices = @transform_0, window_bounds = array<i64: 128, 32>}, {pipeline_mode = #tpu.pipeline_mode<synchronous>, transform_indices = @transform_1, window_bounds = array<i64: 32, 8>}, {pipeline_mode = #tpu.pipeline_mode<synchronous>, transform_indices = @transform_2, window_bounds = array<i64: 1, 8>}, {pipeline_mode = #tpu.pipeline_mode<synchronous>, transform_indices = @transform_3, window_bounds = array<i64: 8, 32>}, {pipeline_mode = #tpu.pipeline_mode<synchronous>, transform_indices = @transform_4, window_bounds = array<i64: 1, 32>}, {pipeline_mode = #tpu.pipeline_mode<synchronous>, transform_indices = @transform_5, window_bounds = array<i64: 32, 16>}, {pipeline_mode = #tpu.pipeline_mode<synchronous>, transform_indices = @transform_6, window_bounds = array<i64: 1, 16>}, {pipeline_mode = #tpu.pipeline_mode<synchronous>, transform_indices = @transform_7, window_bounds = array<i64: 1, 16>}, {pipeline_mode = #tpu.pipeline_mode<synchronous>, transform_indices = @transform_8, window_bounds = array<i64: 1, 1>}, {transform_indices = @transform_9, window_bounds = array<i64: 1, 1, 128>}]} {
    %c0 = arith.constant 0 : index
    %c0_0 = arith.constant 0 : index
    %0 = vector.load %arg1[%c0, %c0_0] : memref<128x32xf32, #tpu.memory_space<vmem>>, vector<128x32xf32>
    %c0_1 = arith.constant 0 : index
    %c0_2 = arith.constant 0 : index
    %1 = vector.load %arg2[%c0_1, %c0_2] : memref<32x8xf32, #tpu.memory_space<vmem>>, vector<32x8xf32>
    %cst = arith.constant dense<0.000000e+00> : vector<128x8xf32>
    %2 = tpu.matmul %0, %1, %cst {dimension_numbers = #tpu.dot_dimension_numbers<[1], [0], [0], [1], [0, 0, 1, 1], [], []>} : vector<128x32xf32>, vector<32x8xf32>, vector<128x8xf32> -> vector<128x8xf32>
    %c0_3 = arith.constant 0 : index
    %c0_4 = arith.constant 0 : index
    %3 = vector.load %arg3[%c0_3, %c0_4] : memref<1x8xf32, #tpu.memory_space<vmem>>, vector<1x8xf32>
    %4 = vector.broadcast %3 : vector<1x8xf32> to vector<128x8xf32>
    %5 = arith.addf %2, %4 : vector<128x8xf32>
    %cst_5 = arith.constant 5.000000e-01 : f32
    %6 = vector.broadcast %cst_5 : f32 to vector<128x8xf32>
    %7 = arith.mulf %6, %5 : vector<128x8xf32>
    %cst_6 = arith.constant 0.707106769 : f32
    %8 = vector.broadcast %cst_6 : f32 to vector<128x8xf32>
    %9 = arith.mulf %5, %8 : vector<128x8xf32>
    %10 = math.erf %9 : vector<128x8xf32>
    %cst_7 = arith.constant 1.000000e+00 : f32
    %11 = vector.broadcast %cst_7 : f32 to vector<128x8xf32>
    %12 = arith.addf %11, %10 : vector<128x8xf32>
    %13 = arith.mulf %7, %12 : vector<128x8xf32>
    %c0_8 = arith.constant 0 : index
    %c0_9 = arith.constant 0 : index
    %14 = vector.load %arg4[%c0_8, %c0_9] : memref<8x32xf32, #tpu.memory_space<vmem>>, vector<8x32xf32>
    %cst_10 = arith.constant dense<0.000000e+00> : vector<128x32xf32>
    %15 = tpu.matmul %13, %14, %cst_10 {dimension_numbers = #tpu.dot_dimension_numbers<[1], [0], [0], [1], [0, 0, 1, 1], [], []>} : vector<128x8xf32>, vector<8x32xf32>, vector<128x32xf32> -> vector<128x32xf32>
    %c0_11 = arith.constant 0 : index
    %c0_12 = arith.constant 0 : index
    %16 = vector.load %arg5[%c0_11, %c0_12] : memref<1x32xf32, #tpu.memory_space<vmem>>, vector<1x32xf32>
    %17 = vector.broadcast %16 : vector<1x32xf32> to vector<128x32xf32>
    %18 = arith.addf %15, %17 : vector<128x32xf32>
    %c0_13 = arith.constant 0 : index
    %c0_14 = arith.constant 0 : index
    %19 = vector.load %arg6[%c0_13, %c0_14] : memref<32x16xf32, #tpu.memory_space<vmem>>, vector<32x16xf32>
    %cst_15 = arith.constant dense<0.000000e+00> : vector<128x16xf32>
    %20 = tpu.matmul %18, %19, %cst_15 {dimension_numbers = #tpu.dot_dimension_numbers<[1], [0], [0], [1], [0, 0, 1, 1], [], []>} : vector<128x32xf32>, vector<32x16xf32>, vector<128x16xf32> -> vector<128x16xf32>
    %c0_16 = arith.constant 0 : index
    %c0_17 = arith.constant 0 : index
    %21 = vector.load %arg7[%c0_16, %c0_17] : memref<1x16xf32, #tpu.memory_space<vmem>>, vector<1x16xf32>
    %22 = vector.broadcast %21 : vector<1x16xf32> to vector<128x16xf32>
    %23 = arith.addf %20, %22 : vector<128x16xf32>
    %cst_18 = arith.constant 5.000000e-01 : f32
    %24 = vector.broadcast %cst_18 : f32 to vector<128x16xf32>
    %25 = arith.mulf %24, %23 : vector<128x16xf32>
    %cst_19 = arith.constant 0.707106769 : f32
    %26 = vector.broadcast %cst_19 : f32 to vector<128x16xf32>
    %27 = arith.mulf %23, %26 : vector<128x16xf32>
    %28 = math.erf %27 : vector<128x16xf32>
    %cst_20 = arith.constant 1.000000e+00 : f32
    %29 = vector.broadcast %cst_20 : f32 to vector<128x16xf32>
    %30 = arith.addf %29, %28 : vector<128x16xf32>
    %31 = arith.mulf %25, %30 : vector<128x16xf32>
    %c0_21 = arith.constant 0 : index
    %c0_22 = arith.constant 0 : index
    %32 = vector.load %arg8[%c0_21, %c0_22] : memref<1x16xf32, #tpu.memory_space<vmem>>, vector<1x16xf32>
    %cst_23 = arith.constant dense<0.000000e+00> : vector<1x128xf32>
    %33 = tpu.matmul %32, %31, %cst_23 {dimension_numbers = #tpu.dot_dimension_numbers<[1], [1], [0], [0], [0, 0, 1, 0], [], []>} : vector<1x16xf32>, vector<128x16xf32>, vector<1x128xf32> -> vector<1x128xf32>
    %c0_24 = arith.constant 0 : index
    %c0_25 = arith.constant 0 : index
    %34 = vector.load %arg9[%c0_24, %c0_25] : memref<1x1xf32, #tpu.memory_space<vmem>>, vector<1x1xf32>
    %35 = vector.broadcast %34 : vector<1x1xf32> to vector<1x128xf32>
    %36 = arith.addf %33, %35 : vector<1x128xf32>
    %37 = vector.shape_cast %36 : vector<1x128xf32> to vector<1x1x128xf32>
    %c0_26 = arith.constant 0 : index
    %c0_27 = arith.constant 0 : index
    %c0_28 = arith.constant 0 : index
    %38 = vector.load %arg10[%c0_26, %c0_27, %c0_28] : memref<1x1x128xf32, #tpu.memory_space<vmem>>, vector<1x1x128xf32>
    tpu.vector_store %arg10[%c0_26, %c0_27, %c0_28], %37 {strides = array<i32>} : memref<1x1x128xf32, #tpu.memory_space<vmem>>, vector<1x1x128xf32>,
    return
  }
  func.func @transform_0(%arg0: i32) -> (i32, i32) {
    %c0_i32 = arith.constant 0 : i32
    %c0_i32_0 = arith.constant 0 : i32
    return %arg0, %c0_i32 : i32, i32
  }
  func.func @transform_1(%arg0: i32) -> (i32, i32) {
    %c0_i32 = arith.constant 0 : i32
    %c0_i32_0 = arith.constant 0 : i32
    %c0_i32_1 = arith.constant 0 : i32
    return %c0_i32, %c0_i32_0 : i32, i32
  }
  func.func @transform_2(%arg0: i32) -> (i32, i32) {
    %c0_i32 = arith.constant 0 : i32
    %c0_i32_0 = arith.constant 0 : i32
    %c0_i32_1 = arith.constant 0 : i32
    return %c0_i32, %c0_i32_0 : i32, i32
  }
  func.func @transform_3(%arg0: i32) -> (i32, i32) {
    %c0_i32 = arith.constant 0 : i32
    %c0_i32_0 = arith.constant 0 : i32
    %c0_i32_1 = arith.constant 0 : i32
    return %c0_i32, %c0_i32_0 : i32, i32
  }
  func.func @transform_4(%arg0: i32) -> (i32, i32) {
    %c0_i32 = arith.constant 0 : i32
    %c0_i32_0 = arith.constant 0 : i32
    %c0_i32_1 = arith.constant 0 : i32
    return %c0_i32, %c0_i32_0 : i32, i32
  }
  func.func @transform_5(%arg0: i32) -> (i32, i32) {
    %c0_i32 = arith.constant 0 : i32
    %c0_i32_0 = arith.constant 0 : i32
    %c0_i32_1 = arith.constant 0 : i32
    return %c0_i32, %c0_i32_0 : i32, i32
  }
  func.func @transform_6(%arg0: i32) -> (i32, i32) {
    %c0_i32 = arith.constant 0 : i32
    %c0_i32_0 = arith.constant 0 : i32
    %c0_i32_1 = arith.constant 0 : i32
    return %c0_i32, %c0_i32_0 : i32, i32
  }
  func.func @transform_7(%arg0: i32) -> (i32, i32) {
    %c0_i32 = arith.constant 0 : i32
    %c0_i32_0 = arith.constant 0 : i32
    %c0_i32_1 = arith.constant 0 : i32
    return %c0_i32, %c0_i32_0 : i32, i32
  }
  func.func @transform_8(%arg0: i32) -> (i32, i32) {
    %c0_i32 = arith.constant 0 : i32
    %c0_i32_0 = arith.constant 0 : i32
    %c0_i32_1 = arith.constant 0 : i32
    return %c0_i32, %c0_i32_0 : i32, i32
  }
  func.func @transform_9(%arg0: i32) -> (i32, i32, i32) {
    %c0_i32 = arith.constant 0 : i32
    %c0_i32_0 = arith.constant 0 : i32
    %c0_i32_1 = arith.constant 0 : i32
    return %arg0, %c0_i32, %c0_i32_0 : i32, i32, i32
  }
}

</mosaic_0001>

<llo_original>
// kernel: optimized_tree_search.1
$region0: #{optimized_tree_search.1}
  #allocation0 [shape = 'u32[]', space=smem, size = 0x4, offset = 0x4, fixed_abs, tag = 'smem constant byte address 0x4 - core index']
  #allocation1 [shape = 'u32[144,128]{1,0:T(1,128)}', space=vmem, size = 0x12000, scoped, tag = 'internal scratch']
  #allocation2 [shape = 'f32[1,1]{1,0:T(1,128)S(1)}', space=vmem, size = 0x200, scoped, tag = 'scoped memory for optimized_tree_search.1']
  %s0 = inlined_call_operand.vmem [shape: f32[16,32], index: 0, kind: input, shape index: {}]
  %s1 = inlined_call_operand.vmem [shape: f32[32,8], index: 1, kind: input, shape index: {}]
  %s2 = inlined_call_operand.vmem [shape: f32[1,8], index: 2, kind: input, shape index: {}]
  %s3 = inlined_call_operand.vmem [shape: f32[8,32], index: 3, kind: input, shape index: {}]
  %s4 = inlined_call_operand.vmem [shape: f32[1,32], index: 4, kind: input, shape index: {}]
  %s5 = inlined_call_operand.vmem [shape: f32[32,16], index: 5, kind: input, shape index: {}]
  %s6 = inlined_call_operand.vmem [shape: f32[1,16], index: 6, kind: input, shape index: {}]
  %s7 = inlined_call_operand.vmem [shape: f32[1,16], index: 7, kind: input, shape index: {}]
  %s8 = inlined_call_operand.<no memory space> [shape: f32[1,1], index: 8, kind: input, shape index: {}]
  %s9 = inlined_call_operand.vmem [shape: f32[1,1,128], index: 9, kind: output, shape index: {}]
  %s10 = sld [smem:[#allocation0]]
  $region46: #{optimized_tree_search.1} parent=0
    _
  %s12 = ssub.s32 1, %s10
  %s13 = scalar_select 0, %s12, %s10
  %v14 = vstv %s8
  %15 = vst [vmem:[#allocation2] sm:$0x1] %v14
  // Predicated region
  $region2: #{optimized_tree_search.1} parent=0 // pred_check
    _
  $region3: #{optimized_tree_search.1} parent=0 // pred_check_branch
    %17 = sbr.rel (0) target = $region5
  $region4: #{optimized_tree_search.1} parent=0 // pred_region
    _
  $region5: #{optimized_tree_search.1} parent=0 // pred_fallthru
    _
  // Predicated region
  $region6: #{optimized_tree_search.1} parent=0 // pred_check
    _
  $region7: #{optimized_tree_search.1} parent=0 // pred_check_branch
    %19 = sbr.rel (0) target = $region9
  $region8: #{optimized_tree_search.1} parent=0 // pred_region
    _
  $region9: #{optimized_tree_search.1} parent=0 // pred_fallthru
    _
  // Predicated region
  $region10: #{optimized_tree_search.1} parent=0 // pred_check
    _
  $region11: #{optimized_tree_search.1} parent=0 // pred_check_branch
    %21 = sbr.rel (0) target = $region13
  $region12: #{optimized_tree_search.1} parent=0 // pred_region
    _
  $region13: #{optimized_tree_search.1} parent=0 // pred_fallthru
    _
  // Predicated region
  $region14: #{optimized_tree_search.1} parent=0 // pred_check
    _
  $region15: #{optimized_tree_search.1} parent=0 // pred_check_branch
    %23 = sbr.rel (0) target = $region17
  $region16: #{optimized_tree_search.1} parent=0 // pred_region
    _
  $region17: #{optimized_tree_search.1} parent=0 // pred_fallthru
    _
  // Predicated region
  $region18: #{optimized_tree_search.1} parent=0 // pred_check
    _
  $region19: #{optimized_tree_search.1} parent=0 // pred_check_branch
    %25 = sbr.rel (0) target = $region21
  $region20: #{optimized_tree_search.1} parent=0 // pred_region
    _
  $region21: #{optimized_tree_search.1} parent=0 // pred_fallthru
    _
  // Predicated region
  $region22: #{optimized_tree_search.1} parent=0 // pred_check
    _
  $region23: #{optimized_tree_search.1} parent=0 // pred_check_branch
    %27 = sbr.rel (0) target = $region25
  $region24: #{optimized_tree_search.1} parent=0 // pred_region
    _
  $region25: #{optimized_tree_search.1} parent=0 // pred_fallthru
    _
  // Predicated region
  $region26: #{optimized_tree_search.1} parent=0 // pred_check
    _
  $region27: #{optimized_tree_search.1} parent=0 // pred_check_branch
    %29 = sbr.rel (0) target = $region29
  $region28: #{optimized_tree_search.1} parent=0 // pred_region
    _
  $region29: #{optimized_tree_search.1} parent=0 // pred_fallthru
    _
  // Predicated region
  $region30: #{optimized_tree_search.1} parent=0 // pred_check
    _
  $region31: #{optimized_tree_search.1} parent=0 // pred_check_branch
    %31 = sbr.rel (0) target = $region33
  $region32: #{optimized_tree_search.1} parent=0 // pred_region
    _
  $region33: #{optimized_tree_search.1} parent=0 // pred_fallthru
    _
  // Predicated region
  $region34: #{optimized_tree_search.1} parent=0 // pred_check
    _
  $region35: #{optimized_tree_search.1} parent=0 // pred_check_branch
    %33 = sbr.rel (0) target = $region37
  $region36: #{optimized_tree_search.1} parent=0 // pred_region
    _
  $region37: #{optimized_tree_search.1} parent=0 // pred_fallthru
    _
  %v34 = vld [vmem:[%s0] sm:$0xff]
  %v35 = vld [vmem:[%s0 + $0x8] sm:$0xff]
  %v36 = vld [vmem:[%s0 + $0x10] sm:$0xff]
  %v37 = vld [vmem:[%s0 + $0x18] sm:$0xff]
  %v38 = vld [vmem:[%s0 + $0x20] sm:$0xff]
  %v39 = vld [vmem:[%s0 + $0x28] sm:$0xff]
  %v40 = vld [vmem:[%s0 + $0x30] sm:$0xff]
  %v41 = vld [vmem:[%s0 + $0x38] sm:$0xff]
  %v42 = vld [vmem:[%s0 + $0x40] sm:$0xff]
  %v43 = vld [vmem:[%s0 + $0x48] sm:$0xff]
  %v44 = vld [vmem:[%s0 + $0x50] sm:$0xff]
  %v45 = vld [vmem:[%s0 + $0x58] sm:$0xff]
  %v46 = vld [vmem:[%s0 + $0x60] sm:$0xff]
  %v47 = vld [vmem:[%s0 + $0x68] sm:$0xff]
  %v48 = vld [vmem:[%s0 + $0x70] sm:$0xff]
  %v49 = vld [vmem:[%s0 + $0x78] sm:$0xff]
  %v50 = vld [vmem:[%s1] sm:$0xff]
  %v51 = vld [vmem:[%s1 + $0x8] sm:$0xff]
  %v52 = vld [vmem:[%s1 + $0x10] sm:$0xff]
  %v53 = vld [vmem:[%s1 + $0x18] sm:$0xff]
  %v54 = vld [vmem:[%s2] sm:$0x1]
  %v56 = vlaneseq
  %v57 = vshrl.u32 %v56, 7
  %v58 = vsub.s32 0, %v57
  %v59 = vrot.slane %v54, %v58
  %vm61 = vcmask 261120
  %v63 = vsel %vm61, %v34, 0
  %v66 = vsel %vm61, %v35, 0
  %v69 = vsel %vm61, %v36, 0
  %v72 = vsel %vm61, %v37, 0
  %v75 = vsel %vm61, %v38, 0
  %v78 = vsel %vm61, %v39, 0
  %v81 = vsel %vm61, %v40, 0
  %v84 = vsel %vm61, %v41, 0
  %v87 = vsel %vm61, %v42, 0
  %v90 = vsel %vm61, %v43, 0
  %v93 = vsel %vm61, %v44, 0
  %v96 = vsel %vm61, %v45, 0
  %v99 = vsel %vm61, %v46, 0
  %v102 = vsel %vm61, %v47, 0
  %v105 = vsel %vm61, %v48, 0
  %v108 = vsel %vm61, %v49, 0
  %110 = vmatprep.subr.mxu0 0.0
  %111 = vmatpush1.msra.mxu0 0.0
  %112 = vmatprep.subr.mxu0 0.0
  %113 = vmatpush1.msra.mxu0 0.0
  %114 = vmatprep.subr.mxu0 0.0
  %115 = vmatpush1.msra.mxu0 0.0
  %116 = vmatprep.subr.mxu0 0.0
  %117 = vmatpush1.msra.mxu0 0.0
  %118 = vmatprep.subr.mxu0 0.0
  %119 = vmatpush1.msra.mxu0 0.0
  %120 = vmatprep.subr.mxu0 0.0
  %121 = vmatpush1.msra.mxu0 0.0
  %122 = vmatprep.subr.mxu0 0.0
  %123 = vmatpush1.msra.mxu0 0.0
  %124 = vmatprep.subr.mxu0 0.0
  %125 = vmatpush1.msra.mxu0 0.0
  %126 = vmatprep.subr.mxu0 0.0
  %127 = vmatpush1.msra.mxu0 0.0
  %128 = vmatprep.subr.mxu0 0.0
  %129 = vmatpush1.msra.mxu0 0.0
  %130 = vmatprep.subr.mxu0 0.0
  %131 = vmatpush1.msra.mxu0 0.0
  %132 = vmatprep.subr.mxu0 0.0
  %133 = vmatpush1.msra.mxu0 0.0
  %134 = vmatprep.subr.mxu0 0.0
  %135 = vmatpush1.msra.mxu0 %v53
  %136 = vmatprep.subr.mxu0 0.0
  %137 = vmatpush1.msra.mxu0 %v52
  %138 = vmatprep.subr.mxu0 0.0
  %139 = vmatpush1.msra.mxu0 %v51
  %140 = vmatprep.subr.mxu0 0.0
  %141 = vmatpush1.msra.mxu0 %v50
  %142 = vmatprep.subr.mxu0 0.0
  %143 = vmatpush2.msra.mxu0 0.0
  %144 = vmatprep.subr.mxu0 0.0
  %145 = vmatpush2.msra.mxu0 0.0
  %146 = vmatprep.subr.mxu0 0.0
  %147 = vmatpush2.msra.mxu0 0.0
  %148 = vmatprep.subr.mxu0 0.0
  %149 = vmatpush2.msra.mxu0 0.0
  %150 = vmatprep.subr.mxu0 0.0
  %151 = vmatpush2.msra.mxu0 0.0
  %152 = vmatprep.subr.mxu0 0.0
  %153 = vmatpush2.msra.mxu0 0.0
  %154 = vmatprep.subr.mxu0 0.0
  %155 = vmatpush2.msra.mxu0 0.0
  %156 = vmatprep.subr.mxu0 0.0
  %157 = vmatpush2.msra.mxu0 0.0
  %158 = vmatprep.subr.mxu0 0.0
  %159 = vmatpush2.msra.mxu0 0.0
  %160 = vmatprep.subr.mxu0 0.0
  %161 = vmatpush2.msra.mxu0 0.0
  %162 = vmatprep.subr.mxu0 0.0
  %163 = vmatpush2.msra.mxu0 0.0
  %164 = vmatprep.subr.mxu0 0.0
  %165 = vmatpush2.msra.mxu0 0.0
  %166 = vmatprep.subr.mxu0 0.0
  %167 = vmatpush2.msra.mxu0 0.0
  %168 = vmatprep.subr.mxu0 0.0
  %169 = vmatpush2.msra.mxu0 0.0
  %170 = vmatprep.subr.mxu0 0.0
  %171 = vmatpush2.msra.mxu0 0.0
  %172 = vmatprep.subr.mxu0 0.0
  %173 = vmatpush2.msra.mxu0 0.0
  %174 = vmatprep.mubr.f32.mxu0 0.0
  %175 = vmatmul.mubr.f32.gmra.mxu0 %v63
  %v176 = vpop.f32.mrf.mxu0
  %v177 = vadd.f32 %v59, %v176
  %v178 = vpop.f32.mrf.mxu0
  %179 = vmatprep.mubr.f32.mxu0 0.0
  %180 = vmatmul.mubr.f32.gmra.mxu0 %v66
  %v181 = vpop.f32.mrf.mxu0
  %v182 = vadd.f32 %v59, %v181
  %v183 = vpop.f32.mrf.mxu0
  %184 = vmatprep.mubr.f32.mxu0 0.0
  %185 = vmatmul.mubr.f32.gmra.mxu0 %v69
  %v186 = vpop.f32.mrf.mxu0
  %v187 = vadd.f32 %v59, %v186
  %v188 = vpop.f32.mrf.mxu0
  %189 = vmatprep.mubr.f32.mxu0 0.0
  %190 = vmatmul.mubr.f32.gmra.mxu0 %v72
  %v191 = vpop.f32.mrf.mxu0
  %v192 = vadd.f32 %v59, %v191
  %v193 = vpop.f32.mrf.mxu0
  %194 = vmatprep.mubr.f32.mxu0 0.0
  %195 = vmatmul.mubr.f32.gmra.mxu0 %v75
  %v196 = vpop.f32.mrf.mxu0
  %v197 = vadd.f32 %v59, %v196
  %v198 = vpop.f32.mrf.mxu0
  %199 = vmatprep.mubr.f32.mxu0 0.0
  %200 = vmatmul.mubr.f32.gmra.mxu0 %v78
  %v201 = vpop.f32.mrf.mxu0
  %v202 = vadd.f32 %v59, %v201
  %v203 = vpop.f32.mrf.mxu0
  %204 = vmatprep.mubr.f32.mxu0 0.0
  %205 = vmatmul.mubr.f32.gmra.mxu0 %v81
  %v206 = vpop.f32.mrf.mxu0
  %v207 = vadd.f32 %v59, %v206
  %v208 = vpop.f32.mrf.mxu0
  %209 = vmatprep.mubr.f32.mxu0 0.0
  %210 = vmatmul.mubr.f32.gmra.mxu0 %v84
  %v211 = vpop.f32.mrf.mxu0
  %v212 = vadd.f32 %v59, %v211
  %v213 = vpop.f32.mrf.mxu0
  %214 = vmatprep.mubr.f32.mxu0 0.0
  %215 = vmatmul.mubr.f32.gmra.mxu0 %v87
  %v216 = vpop.f32.mrf.mxu0
  %v217 = vadd.f32 %v59, %v216
  %v218 = vpop.f32.mrf.mxu0
  %219 = vmatprep.mubr.f32.mxu0 0.0
  %220 = vmatmul.mubr.f32.gmra.mxu0 %v90
  %v221 = vpop.f32.mrf.mxu0
  %v222 = vadd.f32 %v59, %v221
  %v223 = vpop.f32.mrf.mxu0
  %224 = vmatprep.mubr.f32.mxu0 0.0
  %225 = vmatmul.mubr.f32.gmra.mxu0 %v93
  %v226 = vpop.f32.mrf.mxu0
  %v227 = vadd.f32 %v59, %v226
  %v228 = vpop.f32.mrf.mxu0
  %229 = vmatprep.mubr.f32.mxu0 0.0
  %230 = vmatmul.mubr.f32.gmra.mxu0 %v96
  %v231 = vpop.f32.mrf.mxu0
  %v232 = vadd.f32 %v59, %v231
  %v233 = vpop.f32.mrf.mxu0
  %234 = vmatprep.mubr.f32.mxu0 0.0
  %235 = vmatmul.mubr.f32.gmra.mxu0 %v99
  %v236 = vpop.f32.mrf.mxu0
  %v237 = vadd.f32 %v59, %v236
  %v238 = vpop.f32.mrf.mxu0
  %239 = vmatprep.mubr.f32.mxu0 0.0
  %240 = vmatmul.mubr.f32.gmra.mxu0 %v102
  %v241 = vpop.f32.mrf.mxu0
  %v242 = vadd.f32 %v59, %v241
  %v243 = vpop.f32.mrf.mxu0
  %244 = vmatprep.mubr.f32.mxu0 0.0
  %245 = vmatmul.mubr.f32.gmra.mxu0 %v105
  %v246 = vpop.f32.mrf.mxu0
  %v247 = vadd.f32 %v59, %v246
  %v248 = vpop.f32.mrf.mxu0
  %249 = vmatprep.mubr.f32.mxu0 0.0
  %250 = vmatmul.mubr.f32.gmra.mxu0 %v108
  %v251 = vpop.f32.mrf.mxu0
  %v252 = vadd.f32 %v59, %v251
  %v253 = vpop.f32.mrf.mxu0
  %254 = vdwg.mxu0
  %v255 = vmul.f32 %v177, 0.5
  %v256 = vmul.f32 %v182, 0.5
  %v257 = vmul.f32 %v187, 0.5
  %v258 = vmul.f32 %v192, 0.5
  %v259 = vmul.f32 %v197, 0.5
  %v260 = vmul.f32 %v202, 0.5
  %v261 = vmul.f32 %v207, 0.5
  %v262 = vmul.f32 %v212, 0.5
  %v263 = vmul.f32 %v217, 0.5
  %v264 = vmul.f32 %v222, 0.5
  %v265 = vmul.f32 %v227, 0.5
  %v266 = vmul.f32 %v232, 0.5
  %v267 = vmul.f32 %v237, 0.5
  %v268 = vmul.f32 %v242, 0.5
  %v269 = vmul.f32 %v247, 0.5
  %v270 = vmul.f32 %v252, 0.5
  %v271 = vmul.f32 %v177, 0.70710677
  %v272 = vmul.f32 %v182, 0.70710677
  %v273 = vmul.f32 %v187, 0.70710677
  %v274 = vmul.f32 %v192, 0.70710677
  %v275 = vmul.f32 %v197, 0.70710677
  %v276 = vmul.f32 %v202, 0.70710677
  %v277 = vmul.f32 %v207, 0.70710677
  %v278 = vmul.f32 %v212, 0.70710677
  %v279 = vmul.f32 %v217, 0.70710677
  %v280 = vmul.f32 %v222, 0.70710677
  %v281 = vmul.f32 %v227, 0.70710677
  %v282 = vmul.f32 %v232, 0.70710677
  %v283 = vmul.f32 %v237, 0.70710677
  %v284 = vmul.f32 %v242, 0.70710677
  %v285 = vmul.f32 %v247, 0.70710677
  %v286 = vmul.f32 %v252, 0.70710677
  %v287 = verf.f32.pop %v271
  %v288 = verf.f32.pop %v272
  %v289 = verf.f32.pop %v273
  %v290 = verf.f32.pop %v274
  %v291 = verf.f32.pop %v275
  %v292 = verf.f32.pop %v276
  %v293 = verf.f32.pop %v277
  %v294 = verf.f32.pop %v278
  %v295 = verf.f32.pop %v279
  %v296 = verf.f32.pop %v280
  %v297 = verf.f32.pop %v281
  %v298 = verf.f32.pop %v282
  %v299 = verf.f32.pop %v283
  %v300 = verf.f32.pop %v284
  %v301 = verf.f32.pop %v285
  %v302 = verf.f32.pop %v286
  %v303 = vadd.f32 %v287, 1.0
  %v304 = vadd.f32 %v288, 1.0
  %v305 = vadd.f32 %v289, 1.0
  %v306 = vadd.f32 %v290, 1.0
  %v307 = vadd.f32 %v291, 1.0
  %v308 = vadd.f32 %v292, 1.0
  %v309 = vadd.f32 %v293, 1.0
  %v310 = vadd.f32 %v294, 1.0
  %v311 = vadd.f32 %v295, 1.0
  %v312 = vadd.f32 %v296, 1.0
  %v313 = vadd.f32 %v297, 1.0
  %v314 = vadd.f32 %v298, 1.0
  %v315 = vadd.f32 %v299, 1.0
  %v316 = vadd.f32 %v300, 1.0
  %v317 = vadd.f32 %v301, 1.0
  %v318 = vadd.f32 %v302, 1.0
  %v319 = vmul.f32 %v255, %v303
  %v320 = vmul.f32 %v256, %v304
  %v321 = vmul.f32 %v257, %v305
  %v322 = vmul.f32 %v258, %v306
  %v323 = vmul.f32 %v259, %v307
  %v324 = vmul.f32 %v260, %v308
  %v325 = vmul.f32 %v261, %v309
  %v326 = vmul.f32 %v262, %v310
  %v327 = vmul.f32 %v263, %v311
  %v328 = vmul.f32 %v264, %v312
  %v329 = vmul.f32 %v265, %v313
  %v330 = vmul.f32 %v266, %v314
  %v331 = vmul.f32 %v267, %v315
  %v332 = vmul.f32 %v268, %v316
  %v333 = vmul.f32 %v269, %v317
  %v334 = vmul.f32 %v270, %v318
  %v335 = vld [vmem:[%s3] sm:$0xff]
  %v336 = vld [vmem:[%s4] sm:$0x1]
  %v338 = vlaneseq
  %v339 = vshrl.u32 %v338, 7
  %v340 = vsub.s32 0, %v339
  %v341 = vrot.slane %v336, %v340
  %vm343 = vcmask 64512
  %v345 = vsel %vm343, %v319, 0
  %v348 = vsel %vm343, %v320, 0
  %v351 = vsel %vm343, %v321, 0
  %v354 = vsel %vm343, %v322, 0
  %v357 = vsel %vm343, %v323, 0
  %v360 = vsel %vm343, %v324, 0
  %v363 = vsel %vm343, %v325, 0
  %v366 = vsel %vm343, %v326, 0
  %v369 = vsel %vm343, %v327, 0
  %v372 = vsel %vm343, %v328, 0
  %v375 = vsel %vm343, %v329, 0
  %v378 = vsel %vm343, %v330, 0
  %v381 = vsel %vm343, %v331, 0
  %v384 = vsel %vm343, %v332, 0
  %v387 = vsel %vm343, %v333, 0
  %v390 = vsel %vm343, %v334, 0
  %392 = vmatprep.subr.mxu0 0.0
  %393 = vmatpush1.msra.mxu0 0.0
  %394 = vmatprep.subr.mxu0 0.0
  %395 = vmatpush1.msra.mxu0 0.0
  %396 = vmatprep.subr.mxu0 0.0
  %397 = vmatpush1.msra.mxu0 0.0
  %398 = vmatprep.subr.mxu0 0.0
  %399 = vmatpush1.msra.mxu0 0.0
  %400 = vmatprep.subr.mxu0 0.0
  %401 = vmatpush1.msra.mxu0 0.0
  %402 = vmatprep.subr.mxu0 0.0
  %403 = vmatpush1.msra.mxu0 0.0
  %404 = vmatprep.subr.mxu0 0.0
  %405 = vmatpush1.msra.mxu0 0.0
  %406 = vmatprep.subr.mxu0 0.0
  %407 = vmatpush1.msra.mxu0 0.0
  %408 = vmatprep.subr.mxu0 0.0
  %409 = vmatpush1.msra.mxu0 0.0
  %410 = vmatprep.subr.mxu0 0.0
  %411 = vmatpush1.msra.mxu0 0.0
  %412 = vmatprep.subr.mxu0 0.0
  %413 = vmatpush1.msra.mxu0 0.0
  %414 = vmatprep.subr.mxu0 0.0
  %415 = vmatpush1.msra.mxu0 0.0
  %416 = vmatprep.subr.mxu0 0.0
  %417 = vmatpush1.msra.mxu0 0.0
  %418 = vmatprep.subr.mxu0 0.0
  %419 = vmatpush1.msra.mxu0 0.0
  %420 = vmatprep.subr.mxu0 0.0
  %421 = vmatpush1.msra.mxu0 0.0
  %422 = vmatprep.subr.mxu0 0.0
  %423 = vmatpush1.msra.mxu0 %v335
  %424 = vmatprep.subr.mxu0 0.0
  %425 = vmatpush2.msra.mxu0 0.0
  %426 = vmatprep.subr.mxu0 0.0
  %427 = vmatpush2.msra.mxu0 0.0
  %428 = vmatprep.subr.mxu0 0.0
  %429 = vmatpush2.msra.mxu0 0.0
  %430 = vmatprep.subr.mxu0 0.0
  %431 = vmatpush2.msra.mxu0 0.0
  %432 = vmatprep.subr.mxu0 0.0
  %433 = vmatpush2.msra.mxu0 0.0
  %434 = vmatprep.subr.mxu0 0.0
  %435 = vmatpush2.msra.mxu0 0.0
  %436 = vmatprep.subr.mxu0 0.0
  %437 = vmatpush2.msra.mxu0 0.0
  %438 = vmatprep.subr.mxu0 0.0
  %439 = vmatpush2.msra.mxu0 0.0
  %440 = vmatprep.subr.mxu0 0.0
  %441 = vmatpush2.msra.mxu0 0.0
  %442 = vmatprep.subr.mxu0 0.0
  %443 = vmatpush2.msra.mxu0 0.0
  %444 = vmatprep.subr.mxu0 0.0
  %445 = vmatpush2.msra.mxu0 0.0
  %446 = vmatprep.subr.mxu0 0.0
  %447 = vmatpush2.msra.mxu0 0.0
  %448 = vmatprep.subr.mxu0 0.0
  %449 = vmatpush2.msra.mxu0 0.0
  %450 = vmatprep.subr.mxu0 0.0
  %451 = vmatpush2.msra.mxu0 0.0
  %452 = vmatprep.subr.mxu0 0.0
  %453 = vmatpush2.msra.mxu0 0.0
  %454 = vmatprep.subr.mxu0 0.0
  %455 = vmatpush2.msra.mxu0 0.0
  %456 = vmatprep.mubr.f32.mxu0 0.0
  %457 = vmatmul.mubr.f32.gmra.mxu0 %v345
  %v458 = vpop.f32.mrf.mxu0
  %v459 = vadd.f32 %v341, %v458
  %v460 = vpop.f32.mrf.mxu0
  %461 = vmatprep.mubr.f32.mxu0 0.0
  %462 = vmatmul.mubr.f32.gmra.mxu0 %v348
  %v463 = vpop.f32.mrf.mxu0
  %v464 = vadd.f32 %v341, %v463
  %v465 = vpop.f32.mrf.mxu0
  %466 = vmatprep.mubr.f32.mxu0 0.0
  %467 = vmatmul.mubr.f32.gmra.mxu0 %v351
  %v468 = vpop.f32.mrf.mxu0
  %v469 = vadd.f32 %v341, %v468
  %v470 = vpop.f32.mrf.mxu0
  %471 = vmatprep.mubr.f32.mxu0 0.0
  %472 = vmatmul.mubr.f32.gmra.mxu0 %v354
  %v473 = vpop.f32.mrf.mxu0
  %v474 = vadd.f32 %v341, %v473
  %v475 = vpop.f32.mrf.mxu0
  %476 = vmatprep.mubr.f32.mxu0 0.0
  %477 = vmatmul.mubr.f32.gmra.mxu0 %v357
  %v478 = vpop.f32.mrf.mxu0
  %v479 = vadd.f32 %v341, %v478
  %v480 = vpop.f32.mrf.mxu0
  %481 = vmatprep.mubr.f32.mxu0 0.0
  %482 = vmatmul.mubr.f32.gmra.mxu0 %v360
  %v483 = vpop.f32.mrf.mxu0
  %v484 = vadd.f32 %v341, %v483
  %v485 = vpop.f32.mrf.mxu0
  %486 = vmatprep.mubr.f32.mxu0 0.0
  %487 = vmatmul.mubr.f32.gmra.mxu0 %v363
  %v488 = vpop.f32.mrf.mxu0
  %v489 = vadd.f32 %v341, %v488
  %v490 = vpop.f32.mrf.mxu0
  %491 = vmatprep.mubr.f32.mxu0 0.0
  %492 = vmatmul.mubr.f32.gmra.mxu0 %v366
  %v493 = vpop.f32.mrf.mxu0
  %v494 = vadd.f32 %v341, %v493
  %v495 = vpop.f32.mrf.mxu0
  %496 = vmatprep.mubr.f32.mxu0 0.0
  %497 = vmatmul.mubr.f32.gmra.mxu0 %v369
  %v498 = vpop.f32.mrf.mxu0
  %v499 = vadd.f32 %v341, %v498
  %v500 = vpop.f32.mrf.mxu0
  %501 = vmatprep.mubr.f32.mxu0 0.0
  %502 = vmatmul.mubr.f32.gmra.mxu0 %v372
  %v503 = vpop.f32.mrf.mxu0
  %v504 = vadd.f32 %v341, %v503
  %v505 = vpop.f32.mrf.mxu0
  %506 = vmatprep.mubr.f32.mxu0 0.0
  %507 = vmatmul.mubr.f32.gmra.mxu0 %v375
  %v508 = vpop.f32.mrf.mxu0
  %v509 = vadd.f32 %v341, %v508
  %v510 = vpop.f32.mrf.mxu0
  %511 = vmatprep.mubr.f32.mxu0 0.0
  %512 = vmatmul.mubr.f32.gmra.mxu0 %v378
  %v513 = vpop.f32.mrf.mxu0
  %v514 = vadd.f32 %v341, %v513
  %v515 = vpop.f32.mrf.mxu0
  %516 = vmatprep.mubr.f32.mxu0 0.0
  %517 = vmatmul.mubr.f32.gmra.mxu0 %v381
  %v518 = vpop.f32.mrf.mxu0
  %v519 = vadd.f32 %v341, %v518
  %v520 = vpop.f32.mrf.mxu0
  %521 = vmatprep.mubr.f32.mxu0 0.0
  %522 = vmatmul.mubr.f32.gmra.mxu0 %v384
  %v523 = vpop.f32.mrf.mxu0
  %v524 = vadd.f32 %v341, %v523
  %v525 = vpop.f32.mrf.mxu0
  %526 = vmatprep.mubr.f32.mxu0 0.0
  %527 = vmatmul.mubr.f32.gmra.mxu0 %v387
  %v528 = vpop.f32.mrf.mxu0
  %v529 = vadd.f32 %v341, %v528
  %v530 = vpop.f32.mrf.mxu0
  %531 = vmatprep.mubr.f32.mxu0 0.0
  %532 = vmatmul.mubr.f32.gmra.mxu0 %v390
  %v533 = vpop.f32.mrf.mxu0
  %v534 = vadd.f32 %v341, %v533
  %v535 = vpop.f32.mrf.mxu0
  %536 = vdwg.mxu0
  %v537 = vld [vmem:[%s5] sm:$0xff]
  %v538 = vld [vmem:[%s5 + $0x8] sm:$0xff]
  %v539 = vld [vmem:[%s5 + $0x10] sm:$0xff]
  %v540 = vld [vmem:[%s5 + $0x18] sm:$0xff]
  %v541 = vld [vmem:[%s6] sm:$0x1]
  %v543 = vlaneseq
  %v544 = vshrl.u32 %v543, 7
  %v545 = vsub.s32 0, %v544
  %v546 = vrot.slane %v541, %v545
  %v549 = vsel %vm61, %v459, 0
  %v552 = vsel %vm61, %v464, 0
  %v555 = vsel %vm61, %v469, 0
  %v558 = vsel %vm61, %v474, 0
  %v561 = vsel %vm61, %v479, 0
  %v564 = vsel %vm61, %v484, 0
  %v567 = vsel %vm61, %v489, 0
  %v570 = vsel %vm61, %v494, 0
  %v573 = vsel %vm61, %v499, 0
  %v576 = vsel %vm61, %v504, 0
  %v579 = vsel %vm61, %v509, 0
  %v582 = vsel %vm61, %v514, 0
  %v585 = vsel %vm61, %v519, 0
  %v588 = vsel %vm61, %v524, 0
  %v591 = vsel %vm61, %v529, 0
  %v594 = vsel %vm61, %v534, 0
  %596 = vmatprep.subr.mxu0 0.0
  %597 = vmatpush1.msra.mxu0 0.0
  %598 = vmatprep.subr.mxu0 0.0
  %599 = vmatpush1.msra.mxu0 0.0
  %600 = vmatprep.subr.mxu0 0.0
  %601 = vmatpush1.msra.mxu0 0.0
  %602 = vmatprep.subr.mxu0 0.0
  %603 = vmatpush1.msra.mxu0 0.0
  %604 = vmatprep.subr.mxu0 0.0
  %605 = vmatpush1.msra.mxu0 0.0
  %606 = vmatprep.subr.mxu0 0.0
  %607 = vmatpush1.msra.mxu0 0.0
  %608 = vmatprep.subr.mxu0 0.0
  %609 = vmatpush1.msra.mxu0 0.0
  %610 = vmatprep.subr.mxu0 0.0
  %611 = vmatpush1.msra.mxu0 0.0
  %612 = vmatprep.subr.mxu0 0.0
  %613 = vmatpush1.msra.mxu0 0.0
  %614 = vmatprep.subr.mxu0 0.0
  %615 = vmatpush1.msra.mxu0 0.0
  %616 = vmatprep.subr.mxu0 0.0
  %617 = vmatpush1.msra.mxu0 0.0
  %618 = vmatprep.subr.mxu0 0.0
  %619 = vmatpush1.msra.mxu0 0.0
  %620 = vmatprep.subr.mxu0 0.0
  %621 = vmatpush1.msra.mxu0 %v540
  %622 = vmatprep.subr.mxu0 0.0
  %623 = vmatpush1.msra.mxu0 %v539
  %624 = vmatprep.subr.mxu0 0.0
  %625 = vmatpush1.msra.mxu0 %v538
  %626 = vmatprep.subr.mxu0 0.0
  %627 = vmatpush1.msra.mxu0 %v537
  %628 = vmatprep.subr.mxu0 0.0
  %629 = vmatpush2.msra.mxu0 0.0
  %630 = vmatprep.subr.mxu0 0.0
  %631 = vmatpush2.msra.mxu0 0.0
  %632 = vmatprep.subr.mxu0 0.0
  %633 = vmatpush2.msra.mxu0 0.0
  %634 = vmatprep.subr.mxu0 0.0
  %635 = vmatpush2.msra.mxu0 0.0
  %636 = vmatprep.subr.mxu0 0.0
  %637 = vmatpush2.msra.mxu0 0.0
  %638 = vmatprep.subr.mxu0 0.0
  %639 = vmatpush2.msra.mxu0 0.0
  %640 = vmatprep.subr.mxu0 0.0
  %641 = vmatpush2.msra.mxu0 0.0
  %642 = vmatprep.subr.mxu0 0.0
  %643 = vmatpush2.msra.mxu0 0.0
  %644 = vmatprep.subr.mxu0 0.0
  %645 = vmatpush2.msra.mxu0 0.0
  %646 = vmatprep.subr.mxu0 0.0
  %647 = vmatpush2.msra.mxu0 0.0
  %648 = vmatprep.subr.mxu0 0.0
  %649 = vmatpush2.msra.mxu0 0.0
  %650 = vmatprep.subr.mxu0 0.0
  %651 = vmatpush2.msra.mxu0 0.0
  %652 = vmatprep.subr.mxu0 0.0
  %653 = vmatpush2.msra.mxu0 0.0
  %654 = vmatprep.subr.mxu0 0.0
  %655 = vmatpush2.msra.mxu0 0.0
  %656 = vmatprep.subr.mxu0 0.0
  %657 = vmatpush2.msra.mxu0 0.0
  %658 = vmatprep.subr.mxu0 0.0
  %659 = vmatpush2.msra.mxu0 0.0
  %660 = vmatprep.mubr.f32.mxu0 0.0
  %661 = vmatmul.mubr.f32.gmra.mxu0 %v549
  %v662 = vpop.f32.mrf.mxu0
  %v663 = vadd.f32 %v546, %v662
  %v664 = vpop.f32.mrf.mxu0
  %665 = vmatprep.mubr.f32.mxu0 0.0
  %666 = vmatmul.mubr.f32.gmra.mxu0 %v552
  %v667 = vpop.f32.mrf.mxu0
  %v668 = vadd.f32 %v546, %v667
  %v669 = vpop.f32.mrf.mxu0
  %670 = vmatprep.mubr.f32.mxu0 0.0
  %671 = vmatmul.mubr.f32.gmra.mxu0 %v555
  %v672 = vpop.f32.mrf.mxu0
  %v673 = vadd.f32 %v546, %v672
  %v674 = vpop.f32.mrf.mxu0
  %675 = vmatprep.mubr.f32.mxu0 0.0
  %676 = vmatmul.mubr.f32.gmra.mxu0 %v558
  %v677 = vpop.f32.mrf.mxu0
  %v678 = vadd.f32 %v546, %v677
  %v679 = vpop.f32.mrf.mxu0
  %680 = vmatprep.mubr.f32.mxu0 0.0
  %681 = vmatmul.mubr.f32.gmra.mxu0 %v561
  %v682 = vpop.f32.mrf.mxu0
  %v683 = vadd.f32 %v546, %v682
  %v684 = vpop.f32.mrf.mxu0
  %685 = vmatprep.mubr.f32.mxu0 0.0
  %686 = vmatmul.mubr.f32.gmra.mxu0 %v564
  %v687 = vpop.f32.mrf.mxu0
  %v688 = vadd.f32 %v546, %v687
  %v689 = vpop.f32.mrf.mxu0
  %690 = vmatprep.mubr.f32.mxu0 0.0
  %691 = vmatmul.mubr.f32.gmra.mxu0 %v567
  %v692 = vpop.f32.mrf.mxu0
  %v693 = vadd.f32 %v546, %v692
  %v694 = vpop.f32.mrf.mxu0
  %695 = vmatprep.mubr.f32.mxu0 0.0
  %696 = vmatmul.mubr.f32.gmra.mxu0 %v570
  %v697 = vpop.f32.mrf.mxu0
  %v698 = vadd.f32 %v546, %v697
  %v699 = vpop.f32.mrf.mxu0
  %700 = vmatprep.mubr.f32.mxu0 0.0
  %701 = vmatmul.mubr.f32.gmra.mxu0 %v573
  %v702 = vpop.f32.mrf.mxu0
  %v703 = vadd.f32 %v546, %v702
  %v704 = vpop.f32.mrf.mxu0
  %705 = vmatprep.mubr.f32.mxu0 0.0
  %706 = vmatmul.mubr.f32.gmra.mxu0 %v576
  %v707 = vpop.f32.mrf.mxu0
  %v708 = vadd.f32 %v546, %v707
  %v709 = vpop.f32.mrf.mxu0
  %710 = vmatprep.mubr.f32.mxu0 0.0
  %711 = vmatmul.mubr.f32.gmra.mxu0 %v579
  %v712 = vpop.f32.mrf.mxu0
  %v713 = vadd.f32 %v546, %v712
  %v714 = vpop.f32.mrf.mxu0
  %715 = vmatprep.mubr.f32.mxu0 0.0
  %716 = vmatmul.mubr.f32.gmra.mxu0 %v582
  %v717 = vpop.f32.mrf.mxu0
  %v718 = vadd.f32 %v546, %v717
  %v719 = vpop.f32.mrf.mxu0
  %720 = vmatprep.mubr.f32.mxu0 0.0
  %721 = vmatmul.mubr.f32.gmra.mxu0 %v585
  %v722 = vpop.f32.mrf.mxu0
  %v723 = vadd.f32 %v546, %v722
  %v724 = vpop.f32.mrf.mxu0
  %725 = vmatprep.mubr.f32.mxu0 0.0
  %726 = vmatmul.mubr.f32.gmra.mxu0 %v588
  %v727 = vpop.f32.mrf.mxu0
  %v728 = vadd.f32 %v546, %v727
  %v729 = vpop.f32.mrf.mxu0
  %730 = vmatprep.mubr.f32.mxu0 0.0
  %731 = vmatmul.mubr.f32.gmra.mxu0 %v591
  %v732 = vpop.f32.mrf.mxu0
  %v733 = vadd.f32 %v546, %v732
  %v734 = vpop.f32.mrf.mxu0
  %735 = vmatprep.mubr.f32.mxu0 0.0
  %736 = vmatmul.mubr.f32.gmra.mxu0 %v594
  %v737 = vpop.f32.mrf.mxu0
  %v738 = vadd.f32 %v546, %v737
  %v739 = vpop.f32.mrf.mxu0
  %740 = vdwg.mxu0
  %v741 = vmul.f32 %v663, 0.5
  %v742 = vmul.f32 %v668, 0.5
  %v743 = vmul.f32 %v673, 0.5
  %v744 = vmul.f32 %v678, 0.5
  %v745 = vmul.f32 %v683, 0.5
  %v746 = vmul.f32 %v688, 0.5
  %v747 = vmul.f32 %v693, 0.5
  %v748 = vmul.f32 %v698, 0.5
  %v749 = vmul.f32 %v703, 0.5
  %v750 = vmul.f32 %v708, 0.5
  %v751 = vmul.f32 %v713, 0.5
  %v752 = vmul.f32 %v718, 0.5
  %v753 = vmul.f32 %v723, 0.5
  %v754 = vmul.f32 %v728, 0.5
  %v755 = vmul.f32 %v733, 0.5
  %v756 = vmul.f32 %v738, 0.5
  %v757 = vmul.f32 %v663, 0.70710677
  %v758 = vmul.f32 %v668, 0.70710677
  %v759 = vmul.f32 %v673, 0.70710677
  %v760 = vmul.f32 %v678, 0.70710677
  %v761 = vmul.f32 %v683, 0.70710677
  %v762 = vmul.f32 %v688, 0.70710677
  %v763 = vmul.f32 %v693, 0.70710677
  %v764 = vmul.f32 %v698, 0.70710677
  %v765 = vmul.f32 %v703, 0.70710677
  %v766 = vmul.f32 %v708, 0.70710677
  %v767 = vmul.f32 %v713, 0.70710677
  %v768 = vmul.f32 %v718, 0.70710677
  %v769 = vmul.f32 %v723, 0.70710677
  %v770 = vmul.f32 %v728, 0.70710677
  %v771 = vmul.f32 %v733, 0.70710677
  %v772 = vmul.f32 %v738, 0.70710677
  %v773 = verf.f32.pop %v757
  %v774 = verf.f32.pop %v758
  %v775 = verf.f32.pop %v759
  %v776 = verf.f32.pop %v760
  %v777 = verf.f32.pop %v761
  %v778 = verf.f32.pop %v762
  %v779 = verf.f32.pop %v763
  %v780 = verf.f32.pop %v764
  %v781 = verf.f32.pop %v765
  %v782 = verf.f32.pop %v766
  %v783 = verf.f32.pop %v767
  %v784 = verf.f32.pop %v768
  %v785 = verf.f32.pop %v769
  %v786 = verf.f32.pop %v770
  %v787 = verf.f32.pop %v771
  %v788 = verf.f32.pop %v772
  %v789 = vadd.f32 %v773, 1.0
  %v790 = vadd.f32 %v774, 1.0
  %v791 = vadd.f32 %v775, 1.0
  %v792 = vadd.f32 %v776, 1.0
  %v793 = vadd.f32 %v777, 1.0
  %v794 = vadd.f32 %v778, 1.0
  %v795 = vadd.f32 %v779, 1.0
  %v796 = vadd.f32 %v780, 1.0
  %v797 = vadd.f32 %v781, 1.0
  %v798 = vadd.f32 %v782, 1.0
  %v799 = vadd.f32 %v783, 1.0
  %v800 = vadd.f32 %v784, 1.0
  %v801 = vadd.f32 %v785, 1.0
  %v802 = vadd.f32 %v786, 1.0
  %v803 = vadd.f32 %v787, 1.0
  %v804 = vadd.f32 %v788, 1.0
  %v805 = vmul.f32 %v741, %v789
  %v806 = vmul.f32 %v742, %v790
  %v807 = vmul.f32 %v743, %v791
  %v808 = vmul.f32 %v744, %v792
  %v809 = vmul.f32 %v745, %v793
  %v810 = vmul.f32 %v746, %v794
  %v811 = vmul.f32 %v747, %v795
  %v812 = vmul.f32 %v748, %v796
  %v813 = vmul.f32 %v749, %v797
  %v814 = vmul.f32 %v750, %v798
  %v815 = vmul.f32 %v751, %v799
  %v816 = vmul.f32 %v752, %v800
  %v817 = vmul.f32 %v753, %v801
  %v818 = vmul.f32 %v754, %v802
  %v819 = vmul.f32 %v755, %v803
  %v820 = vmul.f32 %v756, %v804
  %v821 = vld [vmem:[%s7] sm:$0x1]
  %v822 = vld [vmem:[#allocation2] sm:$0x1]
  %824 = vset.pattern.permute.xlu0 0
  %825 = vperm.xlu0 %824, %v822
  %v826 = vpop.permute.xlu0 %825
  %v828 = vlaneseq
  %v829 = vshrl.u32 %v828, 7
  %v830 = vsub.s32 0, %v829
  %v831 = vrot.slane %v826, %v830
  %vm832 = vcmask 130048
  %v834 = vsel %vm832, %v821, 0
  %v837 = vsel %vm832, %v805, 0
  %v840 = vsel %vm832, %v806, 0
  %v843 = vsel %vm832, %v807, 0
  %v846 = vsel %vm832, %v808, 0
  %v849 = vsel %vm832, %v809, 0
  %v852 = vsel %vm832, %v810, 0
  %v855 = vsel %vm832, %v811, 0
  %v858 = vsel %vm832, %v812, 0
  %v861 = vsel %vm832, %v813, 0
  %v864 = vsel %vm832, %v814, 0
  %v867 = vsel %vm832, %v815, 0
  %v870 = vsel %vm832, %v816, 0
  %v873 = vsel %vm832, %v817, 0
  %v876 = vsel %vm832, %v818, 0
  %v879 = vsel %vm832, %v819, 0
  %v882 = vsel %vm832, %v820, 0
  %884 = vmatprep.subr.mxu0 0.0
  %885 = vmatpush1.xpose.msra.mxu0 %v882
  %886 = vmatprep.subr.mxu0 0.0
  %887 = vmatpush1.xpose.msra.mxu0 %v879
  %888 = vmatprep.subr.mxu0 0.0
  %889 = vmatpush1.xpose.msra.mxu0 %v876
  %890 = vmatprep.subr.mxu0 0.0
  %891 = vmatpush1.xpose.msra.mxu0 %v873
  %892 = vmatprep.subr.mxu0 0.0
  %893 = vmatpush1.xpose.msra.mxu0 %v870
  %894 = vmatprep.subr.mxu0 0.0
  %895 = vmatpush1.xpose.msra.mxu0 %v867
  %896 = vmatprep.subr.mxu0 0.0
  %897 = vmatpush1.xpose.msra.mxu0 %v864
  %898 = vmatprep.subr.mxu0 0.0
  %899 = vmatpush1.xpose.msra.mxu0 %v861
  %900 = vmatprep.subr.mxu0 0.0
  %901 = vmatpush1.xpose.msra.mxu0 %v858
  %902 = vmatprep.subr.mxu0 0.0
  %903 = vmatpush1.xpose.msra.mxu0 %v855
  %904 = vmatprep.subr.mxu0 0.0
  %905 = vmatpush1.xpose.msra.mxu0 %v852
  %906 = vmatprep.subr.mxu0 0.0
  %907 = vmatpush1.xpose.msra.mxu0 %v849
  %908 = vmatprep.subr.mxu0 0.0
  %909 = vmatpush1.xpose.msra.mxu0 %v846
  %910 = vmatprep.subr.mxu0 0.0
  %911 = vmatpush1.xpose.msra.mxu0 %v843
  %912 = vmatprep.subr.mxu0 0.0
  %913 = vmatpush1.xpose.msra.mxu0 %v840
  %914 = vmatprep.subr.mxu0 0.0
  %915 = vmatpush1.xpose.msra.mxu0 %v837
  %916 = vmatprep.subr.mxu0 0.0
  %917 = vmatpush2.xpose.msra.mxu0 0.0
  %918 = vmatprep.subr.mxu0 0.0
  %919 = vmatpush2.xpose.msra.mxu0 0.0
  %920 = vmatprep.subr.mxu0 0.0
  %921 = vmatpush2.xpose.msra.mxu0 0.0
  %922 = vmatprep.subr.mxu0 0.0
  %923 = vmatpush2.xpose.msra.mxu0 0.0
  %924 = vmatprep.subr.mxu0 0.0
  %925 = vmatpush2.xpose.msra.mxu0 0.0
  %926 = vmatprep.subr.mxu0 0.0
  %927 = vmatpush2.xpose.msra.mxu0 0.0
  %928 = vmatprep.subr.mxu0 0.0
  %929 = vmatpush2.xpose.msra.mxu0 0.0
  %930 = vmatprep.subr.mxu0 0.0
  %931 = vmatpush2.xpose.msra.mxu0 0.0
  %932 = vmatprep.subr.mxu0 0.0
  %933 = vmatpush2.xpose.msra.mxu0 0.0
  %934 = vmatprep.subr.mxu0 0.0
  %935 = vmatpush2.xpose.msra.mxu0 0.0
  %936 = vmatprep.subr.mxu0 0.0
  %937 = vmatpush2.xpose.msra.mxu0 0.0
  %938 = vmatprep.subr.mxu0 0.0
  %939 = vmatpush2.xpose.msra.mxu0 0.0
  %940 = vmatprep.subr.mxu0 0.0
  %941 = vmatpush2.xpose.msra.mxu0 0.0
  %942 = vmatprep.subr.mxu0 0.0
  %943 = vmatpush2.xpose.msra.mxu0 0.0
  %944 = vmatprep.subr.mxu0 0.0
  %945 = vmatpush2.xpose.msra.mxu0 0.0
  %946 = vmatprep.subr.mxu0 0.0
  %947 = vmatpush2.xpose.msra.mxu0 0.0
  %948 = vmatprep.mubr.f32.mxu0 0.0
  %949 = vmatmul.mubr.f32.gmra.mxu0 %v834
  %v950 = vpop.f32.mrf.mxu0
  %v951 = vadd.f32 %v831, %v950
  %v952 = vpop.f32.mrf.mxu0
  %953 = vdwg.mxu0
  %954 = vst [vmem:[%s9] sm:$0x1] %v951
  // Predicated region
  $region38: #{optimized_tree_search.1} parent=0 // pred_check
    _
  $region39: #{optimized_tree_search.1} parent=0 // pred_check_branch
    %956 = sbr.rel (0) target = $region41
  $region40: #{optimized_tree_search.1} parent=0 // pred_region
    _
  $region41: #{optimized_tree_search.1} parent=0 // pred_fallthru
    _
  // Predicated region
  $region42: #{optimized_tree_search.1} parent=0 // pred_check
    _
  $region43: #{optimized_tree_search.1} parent=0 // pred_check_branch
    %958 = sbr.rel (0) target = $region45
  $region44: #{optimized_tree_search.1} parent=0 // pred_region
    _
  $region45: #{optimized_tree_search.1} parent=0 // pred_fallthru
    _

</llo_original>
